<compile_context>
chip_gen: v7x
topology: tpu7x:2x2x1
jax: 0.10.0
libtpu: 0.0.40
codegen_flags: <defaults>
</compile_context>

<pallas_src>
import functools

import jax
import jax.numpy as jnp
from jax.experimental import pallas as pl
from jax.experimental.pallas import tpu as pltpu

LANE = 128      # TPU vreg lane width
SUBLANE = 8     # TPU vreg sublane count (f32)
TB_CAP = 2048   # max batch-tile rows (only a few MiB of VMEM at this size)


def _round_up(x, m):
    return (x + m - 1) // m * m


def _is_v5e():
    """Best-effort detection of TPU v5e (lowest-HBM-bandwidth generation)."""
    try:
        kind = jax.devices()[0].device_kind.lower()
    except Exception:
        return False
    return ("v5 lite" in kind) or ("v5e" in kind) or ("v5litepod" in kind)


def _mlp_kernel(x_ref, w1_ref, b1_ref, w2_ref, b2_ref, w3_ref, b3_ref, o_ref):
    # fc1 + ReLU: bf16 MXU operands, f32 accumulation, f32 bias/ReLU.
    h = jnp.dot(x_ref[...], w1_ref[...], preferred_element_type=jnp.float32)
    h = jnp.maximum(h + b1_ref[...], 0.0)
    # fc2 + ReLU
    h = jnp.dot(h.astype(w2_ref.dtype), w2_ref[...],
                preferred_element_type=jnp.float32)
    h = jnp.maximum(h + b2_ref[...], 0.0)
    # fc3 (no activation)
    h = jnp.dot(h.astype(w3_ref.dtype), w3_ref[...],
                preferred_element_type=jnp.float32)
    o_ref[...] = (h + b3_ref[...]).astype(o_ref.dtype)


def prepare_params(w1, b1, w2, b2, w3, b3, pad_output_lanes=None):
    """One-time parameter prep (outside the hot path).

    PyTorch [out, in] weights -> [in, out] bf16, hidden dim zero-padded to 128
    lanes. W1's input (K) dim keeps its true size so x needs no lane padding.
    W3's output dim is padded to 128 lanes for lane-dense stores, except on
    v5e where the narrow output saves 8x HBM write traffic. Zero padding is
    exact: padded hidden lanes stay 0 through bias+ReLU and contribute nothing
    downstream. Biases stay f32 as [1, out].
    """
    if pad_output_lanes is None:
        pad_output_lanes = not _is_v5e()

    in_features = w1.shape[1]
    hid_p = _round_up(w1.shape[0], LANE)
    out_p = _round_up(w3.shape[0], LANE) if pad_output_lanes else w3.shape[0]

    def pad_w(w_t, rows, cols):            # w_t already [in, out], f32
        out = jnp.zeros((rows, cols), jnp.float32)
        out = out.at[: w_t.shape[0], : w_t.shape[1]].set(w_t)
        return out.astype(jnp.bfloat16)

    def pad_b(b, cols):
        return jnp.zeros((1, cols), jnp.float32).at[0, : b.shape[0]].set(b)

    return (
        pad_w(w1.T, in_features, hid_p), pad_b(b1, hid_p),
        pad_w(w2.T, hid_p, hid_p), pad_b(b2, hid_p),
        pad_w(w3.T, hid_p, out_p), pad_b(b3, out_p),
    )


@functools.partial(jax.jit, static_argnames=("num_classes",))
def mlp_forward(x, params, *, num_classes):
    """x: [B, input_size] f32; params: output of prepare_params."""
    w1, b1, w2, b2, w3, b3 = params
    batch, in_features = x.shape
    hid_p = w2.shape[0]
    out_p = w3.shape[1]

    # Batch tiling: pad batch only to a sublane multiple (<=7 extra rows),
    # use a cdiv grid so awkward batches are never rounded up to the tile
    # size, and keep >=2 grid steps when possible so v7x can use both TCs.
    batch_p = _round_up(batch, SUBLANE)
    if batch_p >= 2 * SUBLANE:
        tb = min(TB_CAP, _round_up(pl.cdiv(batch_p, 2), SUBLANE))
    else:
        tb = batch_p
    grid = (pl.cdiv(batch_p, tb),)

    x = x.astype(jnp.bfloat16)
    if batch_p != batch:
        x = jnp.pad(x, ((0, batch_p - batch), (0, 0)))

    flops = 2 * batch_p * (in_features * hid_p + hid_p * hid_p + hid_p * out_p)
    bytes_accessed = (
        2 * batch_p * in_features                                   # x (bf16)
        + 4 * batch_p * out_p                                       # out (f32)
        + 2 * (in_features * hid_p + hid_p * hid_p + hid_p * out_p) # weights
        + 4 * (2 * hid_p + out_p)                                   # biases
    )

    out_padded = pl.pallas_call(
        _mlp_kernel,
        out_shape=jax.ShapeDtypeStruct((batch_p, out_p), jnp.float32),
        grid_spec=pltpu.PrefetchScalarGridSpec(
            num_scalar_prefetch=0,
            grid=grid,
            in_specs=[
                pl.BlockSpec((tb, in_features), lambda i: (i, 0)),     # x tile
                pl.BlockSpec((in_features, hid_p), lambda i: (0, 0)),  # W1
                pl.BlockSpec((1, hid_p), lambda i: (0, 0)),            # b1
                pl.BlockSpec((hid_p, hid_p), lambda i: (0, 0)),        # W2
                pl.BlockSpec((1, hid_p), lambda i: (0, 0)),            # b2
                pl.BlockSpec((hid_p, out_p), lambda i: (0, 0)),        # W3
                pl.BlockSpec((1, out_p), lambda i: (0, 0)),            # b3
            ],
            out_specs=pl.BlockSpec((tb, out_p), lambda i: (i, 0)),
        ),
        compiler_params=pltpu.CompilerParams(
            dimension_semantics=("parallel",),
            # Let the bf16 cast / batch padding of x fuse into the pallas
            # operand instead of materializing a padded copy in HBM.
            allow_input_fusion=[True] + [False] * 6,
        ),
        cost_estimate=pl.CostEstimate(
            flops=flops, transcendentals=0, bytes_accessed=bytes_accessed
        ),
    )(x, w1, b1, w2, b2, w3, b3)

    # Slice off padding (no-op when nothing was padded; fused into same jit).
    return out_padded[:batch, :num_classes]


def _truncated_normal(key, shape, threshold=0.02):
    # Matches truncnorm.rvs(-threshold, threshold, size): std normal truncated.
    return jax.random.truncated_normal(
        key, -threshold, threshold, shape, dtype=jnp.float32
    )


if __name__ == "__main__":
    input_size, hidden_size, num_classes = 32, 32, 16
    batch = 8

    key = jax.random.PRNGKey(0)
    kx, k1w, k1b, k2w, k2b, k3w, k3b = jax.random.split(key, 7)

    x = jax.random.normal(kx, (batch, input_size), dtype=jnp.float32)

    # Parameters in PyTorch nn.Linear layout: weight [out, in], bias [out].
    w1 = _truncated_normal(k1w, (hidden_size, input_size))
    b1 = _truncated_normal(k1b, (hidden_size,))
    w2 = _truncated_normal(k2w, (hidden_size, hidden_size))
    b2 = _truncated_normal(k2b, (hidden_size,))
    w3 = _truncated_normal(k3w, (num_classes, hidden_size))
    b3 = _truncated_normal(k3b, (num_classes,))

    # One-time parameter prep (transpose + pad + bf16 cast), outside hot path.
    params = prepare_params(w1, b1, w2, b2, w3, b3)
    params = jax.tree_util.tree_map(jax.block_until_ready, params)

    out = mlp_forward(x, params, num_classes=num_classes)
    jax.block_until_ready(out)

    # Pure-f32 reference against the original (unpadded, untransposed) params.
    ref = jnp.maximum(x @ w1.T + b1, 0.0)
    ref = jnp.maximum(ref @ w2.T + b2, 0.0)
    ref = ref @ w3.T + b3
    assert out.shape == (batch, num_classes)
    # Matmul operands are bf16 -> loosened tolerance vs the f32 reference.
    assert jnp.allclose(out, ref, atol=1e-2), "mismatch vs reference"

    print("KERNEL_OK")
</pallas_src>

<mosaic_0001>
module attributes {stable_mosaic.version = 11 : i64} {
  func.func @_mlp_kernel(%arg0: i32, %arg1: memref<8x32xbf16, #tpu.memory_space<vmem>>, %arg2: memref<32x128xbf16, #tpu.memory_space<vmem>>, %arg3: memref<1x128xf32, #tpu.memory_space<vmem>>, %arg4: memref<128x128xbf16, #tpu.memory_space<vmem>>, %arg5: memref<1x128xf32, #tpu.memory_space<vmem>>, %arg6: memref<128x128xbf16, #tpu.memory_space<vmem>>, %arg7: memref<1x128xf32, #tpu.memory_space<vmem>>, %arg8: memref<8x128xf32, #tpu.memory_space<vmem>>) attributes {dimension_semantics = [#tpu.dimension_semantics<parallel>], iteration_bounds = array<i64: 1>, scalar_prefetch = 0 : i64, scratch_operands = 0 : i64, tpu.core_type = #tpu.core_type<tc>, window_params = [{transform_indices = @transform_0, window_bounds = array<i64: 8, 32>}, {pipeline_mode = #tpu.pipeline_mode<synchronous>, transform_indices = @transform_1, window_bounds = array<i64: 32, 128>}, {pipeline_mode = #tpu.pipeline_mode<synchronous>, transform_indices = @transform_2, window_bounds = array<i64: 1, 128>}, {pipeline_mode = #tpu.pipeline_mode<synchronous>, transform_indices = @transform_3, window_bounds = array<i64: 128, 128>}, {pipeline_mode = #tpu.pipeline_mode<synchronous>, transform_indices = @transform_4, window_bounds = array<i64: 1, 128>}, {pipeline_mode = #tpu.pipeline_mode<synchronous>, transform_indices = @transform_5, window_bounds = array<i64: 128, 128>}, {pipeline_mode = #tpu.pipeline_mode<synchronous>, transform_indices = @transform_6, window_bounds = array<i64: 1, 128>}, {transform_indices = @transform_7, window_bounds = array<i64: 8, 128>}]} {
    %c0 = arith.constant 0 : index
    %c0_0 = arith.constant 0 : index
    %0 = vector.load %arg1[%c0, %c0_0] : memref<8x32xbf16, #tpu.memory_space<vmem>>, vector<8x32xbf16>
    %c0_1 = arith.constant 0 : index
    %c0_2 = arith.constant 0 : index
    %1 = vector.load %arg2[%c0_1, %c0_2] : memref<32x128xbf16, #tpu.memory_space<vmem>>, vector<32x128xbf16>
    %cst = arith.constant dense<0.000000e+00> : vector<8x128xf32>
    %2 = tpu.matmul %0, %1, %cst {dimension_numbers = #tpu.dot_dimension_numbers<[1], [0], [0], [1], [0, 0, 1, 1], [], []>} : vector<8x32xbf16>, vector<32x128xbf16>, vector<8x128xf32> -> vector<8x128xf32>
    %c0_3 = arith.constant 0 : index
    %c0_4 = arith.constant 0 : index
    %3 = vector.load %arg3[%c0_3, %c0_4] : memref<1x128xf32, #tpu.memory_space<vmem>>, vector<1x128xf32>
    %4 = vector.broadcast %3 : vector<1x128xf32> to vector<8x128xf32>
    %5 = arith.addf %2, %4 : vector<8x128xf32>
    %cst_5 = arith.constant 0.000000e+00 : f32
    %6 = vector.broadcast %cst_5 : f32 to vector<8x128xf32>
    %7 = arith.maximumf %5, %6 : vector<8x128xf32>
    %8 = arith.truncf %7 : vector<8x128xf32> to vector<8x128xbf16>
    %c0_6 = arith.constant 0 : index
    %c0_7 = arith.constant 0 : index
    %9 = vector.load %arg4[%c0_6, %c0_7] : memref<128x128xbf16, #tpu.memory_space<vmem>>, vector<128x128xbf16>
    %cst_8 = arith.constant dense<0.000000e+00> : vector<8x128xf32>
    %10 = tpu.matmul %8, %9, %cst_8 {dimension_numbers = #tpu.dot_dimension_numbers<[1], [0], [0], [1], [0, 0, 1, 1], [], []>} : vector<8x128xbf16>, vector<128x128xbf16>, vector<8x128xf32> -> vector<8x128xf32>
    %c0_9 = arith.constant 0 : index
    %c0_10 = arith.constant 0 : index
    %11 = vector.load %arg5[%c0_9, %c0_10] : memref<1x128xf32, #tpu.memory_space<vmem>>, vector<1x128xf32>
    %12 = vector.broadcast %11 : vector<1x128xf32> to vector<8x128xf32>
    %13 = arith.addf %10, %12 : vector<8x128xf32>
    %cst_11 = arith.constant 0.000000e+00 : f32
    %14 = vector.broadcast %cst_11 : f32 to vector<8x128xf32>
    %15 = arith.maximumf %13, %14 : vector<8x128xf32>
    %16 = arith.truncf %15 : vector<8x128xf32> to vector<8x128xbf16>
    %c0_12 = arith.constant 0 : index
    %c0_13 = arith.constant 0 : index
    %17 = vector.load %arg6[%c0_12, %c0_13] : memref<128x128xbf16, #tpu.memory_space<vmem>>, vector<128x128xbf16>
    %cst_14 = arith.constant dense<0.000000e+00> : vector<8x128xf32>
    %18 = tpu.matmul %16, %17, %cst_14 {dimension_numbers = #tpu.dot_dimension_numbers<[1], [0], [0], [1], [0, 0, 1, 1], [], []>} : vector<8x128xbf16>, vector<128x128xbf16>, vector<8x128xf32> -> vector<8x128xf32>
    %c0_15 = arith.constant 0 : index
    %c0_16 = arith.constant 0 : index
    %19 = vector.load %arg7[%c0_15, %c0_16] : memref<1x128xf32, #tpu.memory_space<vmem>>, vector<1x128xf32>
    %20 = vector.broadcast %19 : vector<1x128xf32> to vector<8x128xf32>
    %21 = arith.addf %18, %20 : vector<8x128xf32>
    %c0_17 = arith.constant 0 : index
    %c0_18 = arith.constant 0 : index
    %22 = vector.load %arg8[%c0_17, %c0_18] : memref<8x128xf32, #tpu.memory_space<vmem>>, vector<8x128xf32>
    tpu.vector_store %arg8[%c0_17, %c0_18], %21 {strides = array<i32>} : memref<8x128xf32, #tpu.memory_space<vmem>>, vector<8x128xf32>,
    return
  }
  func.func @transform_0(%arg0: i32) -> (i32, i32) {
    %c0_i32 = arith.constant 0 : i32
    %c0_i32_0 = arith.constant 0 : i32
    return %arg0, %c0_i32 : i32, i32
  }
  func.func @transform_1(%arg0: i32) -> (i32, i32) {
    %c0_i32 = arith.constant 0 : i32
    %c0_i32_0 = arith.constant 0 : i32
    %c0_i32_1 = arith.constant 0 : i32
    return %c0_i32, %c0_i32_0 : i32, i32
  }
  func.func @transform_2(%arg0: i32) -> (i32, i32) {
    %c0_i32 = arith.constant 0 : i32
    %c0_i32_0 = arith.constant 0 : i32
    %c0_i32_1 = arith.constant 0 : i32
    return %c0_i32, %c0_i32_0 : i32, i32
  }
  func.func @transform_3(%arg0: i32) -> (i32, i32) {
    %c0_i32 = arith.constant 0 : i32
    %c0_i32_0 = arith.constant 0 : i32
    %c0_i32_1 = arith.constant 0 : i32
    return %c0_i32, %c0_i32_0 : i32, i32
  }
  func.func @transform_4(%arg0: i32) -> (i32, i32) {
    %c0_i32 = arith.constant 0 : i32
    %c0_i32_0 = arith.constant 0 : i32
    %c0_i32_1 = arith.constant 0 : i32
    return %c0_i32, %c0_i32_0 : i32, i32
  }
  func.func @transform_5(%arg0: i32) -> (i32, i32) {
    %c0_i32 = arith.constant 0 : i32
    %c0_i32_0 = arith.constant 0 : i32
    %c0_i32_1 = arith.constant 0 : i32
    return %c0_i32, %c0_i32_0 : i32, i32
  }
  func.func @transform_6(%arg0: i32) -> (i32, i32) {
    %c0_i32 = arith.constant 0 : i32
    %c0_i32_0 = arith.constant 0 : i32
    %c0_i32_1 = arith.constant 0 : i32
    return %c0_i32, %c0_i32_0 : i32, i32
  }
  func.func @transform_7(%arg0: i32) -> (i32, i32) {
    %c0_i32 = arith.constant 0 : i32
    %c0_i32_0 = arith.constant 0 : i32
    return %arg0, %c0_i32 : i32, i32
  }
}

</mosaic_0001>

<llo_original>
// kernel: mlp_forward.2
$region0: #{mlp_forward.2}
  #allocation0 [shape = 'u32[]', space=smem, size = 0x4, offset = 0x4, fixed_abs, tag = 'smem constant byte address 0x4 - core index']
  #allocation1 [shape = 'u32[144,128]{1,0:T(1,128)}', space=vmem, size = 0x12000, scoped, tag = 'internal scratch']
  %s0 = inlined_call_operand.hbm [shape: bf16[32,128], index: 0, kind: input, shape index: {}]
  %s1 = inlined_call_operand.vmem [shape: f32[1,128], index: 1, kind: input, shape index: {}]
  %s2 = inlined_call_operand.hbm [shape: bf16[128,128], index: 2, kind: input, shape index: {}]
  %s3 = inlined_call_operand.vmem [shape: f32[1,128], index: 3, kind: input, shape index: {}]
  %s4 = inlined_call_operand.hbm [shape: bf16[128,128], index: 4, kind: input, shape index: {}]
  %s5 = inlined_call_operand.vmem [shape: f32[1,128], index: 5, kind: input, shape index: {}]
  %s6 = inlined_call_operand.hbm [shape: f32[8,32], index: 6, kind: input, shape index: {}]
  %s7 = inlined_call_operand.hbm [shape: f32[8,128], index: 7, kind: output, shape index: {}]
  %s8 = sld [smem:[#allocation0]]
  $region54: #{mlp_forward.2} parent=0
    _
  %s10 = ssub.s32 1, %s8
  %s11 = scalar_select 0, %s10, %s8
  $region1: #{mlp_forward.2} parent=0
    #allocation2 [shape = 'u8[4096]{0}', space=vmem, size = 0x1000, scoped, tag = 'operand span for operand 6']
    #allocation3 [shape = 's32[1]{0}', space=sflag, size = 0x4, scoped, tag = 'scoped memory for mlp_forward.2']
    #allocation4 [shape = 's32[1]{0}', space=sflag, size = 0x4, scoped, tag = 'scoped memory for mlp_forward.2']
    #allocation5 [shape = 'u8[8192]{0}', space=vmem, size = 0x2000, scoped, tag = 'input window, operand 1, single buffered']
    #allocation6 [shape = 's32[1]{0}', space=sflag, size = 0x4, scoped, tag = 'scoped memory for mlp_forward.2']
    #allocation7 [shape = 'u8[32768]{0}', space=vmem, size = 0x8000, scoped, tag = 'input window, operand 3, single buffered']
    #allocation8 [shape = 'u8[32768]{0}', space=vmem, size = 0x8000, scoped, tag = 'input window, operand 5, single buffered']
    #allocation9 [shape = 's32[1]{0}', space=sflag, size = 0x4, scoped, tag = 'scoped memory for mlp_forward.2']
    #allocation10 [shape = 'u8[4096]{0}', space=vmem, size = 0x1000, scoped, tag = 'output window, operand 0, single buffered']
    #allocation11 [shape = 'u8[2048]{0}', space=vmem, size = 0x800, dematerialized = true, scoped, tag = 'FusionAdapter Buffer %fusion.1 = bf16[8,32]{1,0:T(8,128)(2,1)} fusion(%param_6.1), kind=kLoop, calls=%fused_computation.1.clone, metadata={op_name="jit(mlp_forward)/convert_element_type" stack_frame_id=7}']
    %12 = vsyncpa [#allocation3], 0
    %13 = vsyncpa [#allocation6], 0
    %14 = vsyncpa [#allocation9], 0
    %15 = vsyncpa [#allocation4], 0
    // Predicated region
    $region2: #{mlp_forward.2} parent=1 // pred_check
      _
    $region3: #{mlp_forward.2} parent=1 // pred_check_branch
      %17 = sbr.rel (0) target = $region5
    $region4: #{mlp_forward.2} parent=1 // pred_region
      %s19 = ssub.s32 128, 128
      %20 = vsyncadd [#allocation3], %s19
      %s22 = sshll.u32 [#allocation2], 4
      %s23 = int_to_ptr.vmem [resolvable:$true] %s22
      %25 = dma.hbm_to_vmem [thread:$0]  %s6, 128, %s23, [#allocation3]
    $region5: #{mlp_forward.2} parent=1 // pred_fallthru
      _
    // Predicated region
    $region6: #{mlp_forward.2} parent=1 // pred_check
      _
    $region7: #{mlp_forward.2} parent=1 // pred_check_branch
      %27 = sbr.rel (0) target = $region9
    $region8: #{mlp_forward.2} parent=1 // pred_region
      %s29 = ssub.s32 256, 256
      %30 = vsyncadd [#allocation6], %s29
      %s31 = sshll.u32 [#allocation5], 4
      %s32 = int_to_ptr.vmem [resolvable:$true] %s31
      %37 = dma.hbm_to_vmem [thread:$0]  %s0, 256, %s32, [#allocation6], 64, 64, 4
    $region9: #{mlp_forward.2} parent=1 // pred_fallthru
      _
    // Predicated region
    $region10: #{mlp_forward.2} parent=1 // pred_check
      _
    $region11: #{mlp_forward.2} parent=1 // pred_check_branch
      %39 = sbr.rel (0) target = $region13
    $region12: #{mlp_forward.2} parent=1 // pred_region
      _
    $region13: #{mlp_forward.2} parent=1 // pred_fallthru
      _
    // Predicated region
    $region14: #{mlp_forward.2} parent=1 // pred_check
      _
    $region15: #{mlp_forward.2} parent=1 // pred_check_branch
      %41 = sbr.rel (0) target = $region17
    $region16: #{mlp_forward.2} parent=1 // pred_region
      %s43 = ssub.s32 1024, 1024
      %44 = vsyncadd [#allocation6], %s43
      %s45 = sshll.u32 [#allocation7], 4
      %s46 = int_to_ptr.vmem [resolvable:$true] %s45
      %51 = dma.hbm_to_vmem [thread:$0]  %s2, 1024, %s46, [#allocation6], 64, 64, 4
    $region17: #{mlp_forward.2} parent=1 // pred_fallthru
      _
    // Predicated region
    $region18: #{mlp_forward.2} parent=1 // pred_check
      _
    $region19: #{mlp_forward.2} parent=1 // pred_check_branch
      %53 = sbr.rel (0) target = $region21
    $region20: #{mlp_forward.2} parent=1 // pred_region
      _
    $region21: #{mlp_forward.2} parent=1 // pred_fallthru
      _
    // Predicated region
    $region22: #{mlp_forward.2} parent=1 // pred_check
      _
    $region23: #{mlp_forward.2} parent=1 // pred_check_branch
      %55 = sbr.rel (0) target = $region25
    $region24: #{mlp_forward.2} parent=1 // pred_region
      %s57 = ssub.s32 1024, 1024
      %58 = vsyncadd [#allocation9], %s57
      %s59 = sshll.u32 [#allocation8], 4
      %s60 = int_to_ptr.vmem [resolvable:$true] %s59
      %65 = dma.hbm_to_vmem [thread:$0]  %s4, 1024, %s60, [#allocation9], 64, 64, 4
    $region25: #{mlp_forward.2} parent=1 // pred_fallthru
      _
    // Predicated region
    $region26: #{mlp_forward.2} parent=1 // pred_check
      _
    $region27: #{mlp_forward.2} parent=1 // pred_check_branch
      %67 = sbr.rel (0) target = $region29
    $region28: #{mlp_forward.2} parent=1 // pred_region
      _
    $region29: #{mlp_forward.2} parent=1 // pred_fallthru
      _
    // Predicated region
    $region30: #{mlp_forward.2} parent=1 // pred_check
      _
    $region31: #{mlp_forward.2} parent=1 // pred_check_branch
      %69 = sbr.rel (0) target = $region33
    $region32: #{mlp_forward.2} parent=1 // pred_region
      %70 = dma.done [#allocation3], 128
    $region33: #{mlp_forward.2} parent=1 // pred_fallthru
      _
    // Predicated region
    $region34: #{mlp_forward.2} parent=1 // pred_check
      _
    $region35: #{mlp_forward.2} parent=1 // pred_check_branch
      %72 = sbr.rel (0) target = $region37
    $region36: #{mlp_forward.2} parent=1 // pred_region
      %73 = dma.done [#allocation6], 256
    $region37: #{mlp_forward.2} parent=1 // pred_fallthru
      _
    // Predicated region
    $region38: #{mlp_forward.2} parent=1 // pred_check
      _
    $region39: #{mlp_forward.2} parent=1 // pred_check_branch
      %75 = sbr.rel (0) target = $region41
    $region40: #{mlp_forward.2} parent=1 // pred_region
      %76 = dma.done [#allocation6], 1024
    $region41: #{mlp_forward.2} parent=1 // pred_fallthru
      _
    // Predicated region
    $region42: #{mlp_forward.2} parent=1 // pred_check
      _
    $region43: #{mlp_forward.2} parent=1 // pred_check_branch
      %78 = sbr.rel (0) target = $region45
    $region44: #{mlp_forward.2} parent=1 // pred_region
      %79 = dma.done [#allocation9], 1024
    $region45: #{mlp_forward.2} parent=1 // pred_fallthru
      _
    %v80 = vld [vmem:[#allocation2] sm:$0xff]
    %81 = xla_tuple %v80
    %82 = xla_tuple %81
    %83 = xla_tuple %v80
    %v84 = vpack.c.bf16 0.0, %v80
    %86 = vst [vmem:[#allocation11] sm:$0xf] %v84
    %v88 = vld [vmem:[#allocation11] sm:$0xf]
    %v89 = vld [vmem:[#allocation5] sm:$0xf]
    %v90 = vld [vmem:[#allocation5 + $0x4] sm:$0xf]
    %v91 = vld [vmem:[#allocation5 + $0x8] sm:$0xf]
    %v92 = vld [vmem:[#allocation5 + $0xc] sm:$0xf]
    %v93 = vld [vmem:[%s1] sm:$0x1]
    %v95 = vlaneseq
    %v96 = vshrl.u32 %v95, 7
    %v97 = vsub.s32 0, %v96
    %v98 = vrot.slane %v93, %v97
    %v104 = vunpack.c.l.b16 %v89
    %v105 = vunpack.c.l.b16 %v90
    %v106 = vunpack.c.l.b16 %v91
    %v107 = vunpack.c.l.b16 %v92
    %v108 = vpack.c.b16 %v105, %v104
    %v109 = vpack.c.b16 %v107, %v106
    %vm112 = vcmask 261120
    %v114 = vsel %vm112, %v88, 0
    %116 = vmatprep.subr.bf16.mxu0 0
    %117 = vmatpush1.bf16.msra.mxu0 %v108
    %118 = vmatprep.subr.bf16.mxu0 0
    %119 = vmatpush1.bf16.msra.mxu0 %v109
    %120 = vmatprep.subr.bf16.mxu0 0
    %121 = vmatpush1.bf16.msra.mxu0 0
    %122 = vmatprep.subr.bf16.mxu0 0
    %123 = vmatpush1.bf16.msra.mxu0 0
    %124 = vmatprep.subr.bf16.mxu0 0
    %125 = vmatpush1.bf16.msra.mxu0 0
    %126 = vmatprep.subr.bf16.mxu0 0
    %127 = vmatpush1.bf16.msra.mxu0 0
    %128 = vmatprep.subr.bf16.mxu0 0
    %129 = vmatpush1.bf16.msra.mxu0 0
    %130 = vmatprep.subr.bf16.mxu0 0
    %131 = vmatpush1.bf16.msra.mxu0 0
    %132 = vmatprep.subr.bf16.mxu0 0
    %133 = vmatpush1.bf16.msra.mxu0 0
    %134 = vmatprep.subr.bf16.mxu0 0
    %135 = vmatpush1.bf16.msra.mxu0 0
    %136 = vmatprep.subr.bf16.mxu0 0
    %137 = vmatpush1.bf16.msra.mxu0 0
    %138 = vmatprep.subr.bf16.mxu0 0
    %139 = vmatpush1.bf16.msra.mxu0 0
    %140 = vmatprep.subr.bf16.mxu0 0
    %141 = vmatpush1.bf16.msra.mxu0 0
    %142 = vmatprep.subr.bf16.mxu0 0
    %143 = vmatpush1.bf16.msra.mxu0 0
    %144 = vmatprep.subr.bf16.mxu0 0
    %145 = vmatpush1.bf16.msra.mxu0 0
    %146 = vmatprep.subr.bf16.mxu0 0
    %147 = vmatpush1.bf16.msra.mxu0 0
    %148 = vmatprep.mubr.bf16.mxu0 0
    %149 = vmatmul.mubr.bf16.gmra.mrb[0].mxu0 %v114
    %v150 = vpop.f32.mrb[0].mxu0
    %v151 = vadd.f32 %v98, %v150
    %v152 = vpop.f32.mrb[0].mxu0
    %v153 = vpop.f32.mrb[0].mxu0
    %v154 = vpop.f32.mrb[0].mxu0
    %155 = vdwg.mxu0
    %v156 = vmax.f32 %v151, 0.0
    %v157 = vpack.c.bf16 %v156, %v156
    %v158 = vld [vmem:[#allocation7] sm:$0xf]
    %v159 = vld [vmem:[#allocation7 + $0x4] sm:$0xf]
    %v160 = vld [vmem:[#allocation7 + $0x8] sm:$0xf]
    %v161 = vld [vmem:[#allocation7 + $0xc] sm:$0xf]
    %v162 = vld [vmem:[#allocation7 + $0x10] sm:$0xf]
    %v163 = vld [vmem:[#allocation7 + $0x14] sm:$0xf]
    %v164 = vld [vmem:[#allocation7 + $0x18] sm:$0xf]
    %v165 = vld [vmem:[#allocation7 + $0x1c] sm:$0xf]
    %v166 = vld [vmem:[#allocation7 + $0x20] sm:$0xf]
    %v167 = vld [vmem:[#allocation7 + $0x24] sm:$0xf]
    %v168 = vld [vmem:[#allocation7 + $0x28] sm:$0xf]
    %v169 = vld [vmem:[#allocation7 + $0x2c] sm:$0xf]
    %v170 = vld [vmem:[#allocation7 + $0x30] sm:$0xf]
    %v171 = vld [vmem:[#allocation7 + $0x34] sm:$0xf]
    %v172 = vld [vmem:[#allocation7 + $0x38] sm:$0xf]
    %v173 = vld [vmem:[#allocation7 + $0x3c] sm:$0xf]
    %v174 = vld [vmem:[%s3] sm:$0x1]
    %v176 = vlaneseq
    %v177 = vshrl.u32 %v176, 7
    %v178 = vsub.s32 0, %v177
    %v179 = vrot.slane %v174, %v178
    %v197 = vunpack.c.l.b16 %v158
    %v198 = vunpack.c.l.b16 %v159
    %v199 = vunpack.c.l.b16 %v160
    %v200 = vunpack.c.l.b16 %v161
    %v201 = vunpack.c.l.b16 %v162
    %v202 = vunpack.c.l.b16 %v163
    %v203 = vunpack.c.l.b16 %v164
    %v204 = vunpack.c.l.b16 %v165
    %v205 = vunpack.c.l.b16 %v166
    %v206 = vunpack.c.l.b16 %v167
    %v207 = vunpack.c.l.b16 %v168
    %v208 = vunpack.c.l.b16 %v169
    %v209 = vunpack.c.l.b16 %v170
    %v210 = vunpack.c.l.b16 %v171
    %v211 = vunpack.c.l.b16 %v172
    %v212 = vunpack.c.l.b16 %v173
    %v213 = vpack.c.b16 %v198, %v197
    %v214 = vpack.c.b16 %v200, %v199
    %v215 = vpack.c.b16 %v202, %v201
    %v216 = vpack.c.b16 %v204, %v203
    %v217 = vpack.c.b16 %v206, %v205
    %v218 = vpack.c.b16 %v208, %v207
    %v219 = vpack.c.b16 %v210, %v209
    %v220 = vpack.c.b16 %v212, %v211
    %229 = vmatprep.subr.bf16.mxu0 0
    %230 = vmatpush1.bf16.msra.mxu0 %v213
    %231 = vmatprep.subr.bf16.mxu0 0
    %232 = vmatpush1.bf16.msra.mxu0 %v214
    %233 = vmatprep.subr.bf16.mxu0 0
    %234 = vmatpush1.bf16.msra.mxu0 %v215
    %235 = vmatprep.subr.bf16.mxu0 0
    %236 = vmatpush1.bf16.msra.mxu0 %v216
    %237 = vmatprep.subr.bf16.mxu0 0
    %238 = vmatpush1.bf16.msra.mxu0 %v217
    %239 = vmatprep.subr.bf16.mxu0 0
    %240 = vmatpush1.bf16.msra.mxu0 %v218
    %241 = vmatprep.subr.bf16.mxu0 0
    %242 = vmatpush1.bf16.msra.mxu0 %v219
    %243 = vmatprep.subr.bf16.mxu0 0
    %244 = vmatpush1.bf16.msra.mxu0 %v220
    %245 = vmatprep.subr.bf16.mxu0 0
    %246 = vmatpush1.bf16.msra.mxu0 0
    %247 = vmatprep.subr.bf16.mxu0 0
    %248 = vmatpush1.bf16.msra.mxu0 0
    %249 = vmatprep.subr.bf16.mxu0 0
    %250 = vmatpush1.bf16.msra.mxu0 0
    %251 = vmatprep.subr.bf16.mxu0 0
    %252 = vmatpush1.bf16.msra.mxu0 0
    %253 = vmatprep.subr.bf16.mxu0 0
    %254 = vmatpush1.bf16.msra.mxu0 0
    %255 = vmatprep.subr.bf16.mxu0 0
    %256 = vmatpush1.bf16.msra.mxu0 0
    %257 = vmatprep.subr.bf16.mxu0 0
    %258 = vmatpush1.bf16.msra.mxu0 0
    %259 = vmatprep.subr.bf16.mxu0 0
    %260 = vmatpush1.bf16.msra.mxu0 0
    %261 = vmatprep.mubr.bf16.mxu0 0
    %262 = vmatmul.mubr.bf16.gmra.mrb[0].mxu0 %v157
    %v263 = vpop.f32.mrb[0].mxu0
    %v264 = vadd.f32 %v179, %v263
    %v265 = vpop.f32.mrb[0].mxu0
    %v266 = vpop.f32.mrb[0].mxu0
    %v267 = vpop.f32.mrb[0].mxu0
    %268 = vdwg.mxu0
    %v269 = vmax.f32 %v264, 0.0
    %v270 = vpack.c.bf16 %v269, %v269
    %v271 = vld [vmem:[#allocation8] sm:$0xf]
    %v272 = vld [vmem:[#allocation8 + $0x4] sm:$0xf]
    %v273 = vld [vmem:[#allocation8 + $0x8] sm:$0xf]
    %v274 = vld [vmem:[#allocation8 + $0xc] sm:$0xf]
    %v275 = vld [vmem:[#allocation8 + $0x10] sm:$0xf]
    %v276 = vld [vmem:[#allocation8 + $0x14] sm:$0xf]
    %v277 = vld [vmem:[#allocation8 + $0x18] sm:$0xf]
    %v278 = vld [vmem:[#allocation8 + $0x1c] sm:$0xf]
    %v279 = vld [vmem:[#allocation8 + $0x20] sm:$0xf]
    %v280 = vld [vmem:[#allocation8 + $0x24] sm:$0xf]
    %v281 = vld [vmem:[#allocation8 + $0x28] sm:$0xf]
    %v282 = vld [vmem:[#allocation8 + $0x2c] sm:$0xf]
    %v283 = vld [vmem:[#allocation8 + $0x30] sm:$0xf]
    %v284 = vld [vmem:[#allocation8 + $0x34] sm:$0xf]
    %v285 = vld [vmem:[#allocation8 + $0x38] sm:$0xf]
    %v286 = vld [vmem:[#allocation8 + $0x3c] sm:$0xf]
    %v287 = vld [vmem:[%s5] sm:$0x1]
    %v289 = vlaneseq
    %v290 = vshrl.u32 %v289, 7
    %v291 = vsub.s32 0, %v290
    %v292 = vrot.slane %v287, %v291
    %v310 = vunpack.c.l.b16 %v271
    %v311 = vunpack.c.l.b16 %v272
    %v312 = vunpack.c.l.b16 %v273
    %v313 = vunpack.c.l.b16 %v274
    %v314 = vunpack.c.l.b16 %v275
    %v315 = vunpack.c.l.b16 %v276
    %v316 = vunpack.c.l.b16 %v277
    %v317 = vunpack.c.l.b16 %v278
    %v318 = vunpack.c.l.b16 %v279
    %v319 = vunpack.c.l.b16 %v280
    %v320 = vunpack.c.l.b16 %v281
    %v321 = vunpack.c.l.b16 %v282
    %v322 = vunpack.c.l.b16 %v283
    %v323 = vunpack.c.l.b16 %v284
    %v324 = vunpack.c.l.b16 %v285
    %v325 = vunpack.c.l.b16 %v286
    %v326 = vpack.c.b16 %v311, %v310
    %v327 = vpack.c.b16 %v313, %v312
    %v328 = vpack.c.b16 %v315, %v314
    %v329 = vpack.c.b16 %v317, %v316
    %v330 = vpack.c.b16 %v319, %v318
    %v331 = vpack.c.b16 %v321, %v320
    %v332 = vpack.c.b16 %v323, %v322
    %v333 = vpack.c.b16 %v325, %v324
    %342 = vmatprep.subr.bf16.mxu0 0
    %343 = vmatpush1.bf16.msra.mxu0 %v326
    %344 = vmatprep.subr.bf16.mxu0 0
    %345 = vmatpush1.bf16.msra.mxu0 %v327
    %346 = vmatprep.subr.bf16.mxu0 0
    %347 = vmatpush1.bf16.msra.mxu0 %v328
    %348 = vmatprep.subr.bf16.mxu0 0
    %349 = vmatpush1.bf16.msra.mxu0 %v329
    %350 = vmatprep.subr.bf16.mxu0 0
    %351 = vmatpush1.bf16.msra.mxu0 %v330
    %352 = vmatprep.subr.bf16.mxu0 0
    %353 = vmatpush1.bf16.msra.mxu0 %v331
    %354 = vmatprep.subr.bf16.mxu0 0
    %355 = vmatpush1.bf16.msra.mxu0 %v332
    %356 = vmatprep.subr.bf16.mxu0 0
    %357 = vmatpush1.bf16.msra.mxu0 %v333
    %358 = vmatprep.subr.bf16.mxu0 0
    %359 = vmatpush1.bf16.msra.mxu0 0
    %360 = vmatprep.subr.bf16.mxu0 0
    %361 = vmatpush1.bf16.msra.mxu0 0
    %362 = vmatprep.subr.bf16.mxu0 0
    %363 = vmatpush1.bf16.msra.mxu0 0
    %364 = vmatprep.subr.bf16.mxu0 0
    %365 = vmatpush1.bf16.msra.mxu0 0
    %366 = vmatprep.subr.bf16.mxu0 0
    %367 = vmatpush1.bf16.msra.mxu0 0
    %368 = vmatprep.subr.bf16.mxu0 0
    %369 = vmatpush1.bf16.msra.mxu0 0
    %370 = vmatprep.subr.bf16.mxu0 0
    %371 = vmatpush1.bf16.msra.mxu0 0
    %372 = vmatprep.subr.bf16.mxu0 0
    %373 = vmatpush1.bf16.msra.mxu0 0
    %374 = vmatprep.mubr.bf16.mxu0 0
    %375 = vmatmul.mubr.bf16.gmra.mrb[0].mxu0 %v270
    %v376 = vpop.f32.mrb[0].mxu0
    %v377 = vadd.f32 %v292, %v376
    %v378 = vpop.f32.mrb[0].mxu0
    %v379 = vpop.f32.mrb[0].mxu0
    %v380 = vpop.f32.mrb[0].mxu0
    %381 = vdwg.mxu0
    %382 = vst [vmem:[#allocation10] sm:$0xff] %v377
    // Predicated region
    $region46: #{mlp_forward.2} parent=1 // pred_check
      _
    $region47: #{mlp_forward.2} parent=1 // pred_check_branch
      %384 = sbr.rel (0) target = $region49
    $region48: #{mlp_forward.2} parent=1 // pred_region
      %s386 = ssub.s32 128, 128
      %387 = vsyncadd [#allocation4], %s386
      %s389 = sshll.u32 [#allocation10], 4
      %s390 = int_to_ptr.vmem [resolvable:$true] %s389
      %392 = dma.vmem_to_hbm [thread:$0]  %s390, 128, %s7, [#allocation4]
    $region49: #{mlp_forward.2} parent=1 // pred_fallthru
      _
    // Predicated region
    $region50: #{mlp_forward.2} parent=1 // pred_check
      _
    $region51: #{mlp_forward.2} parent=1 // pred_check_branch
      %394 = sbr.rel (0) target = $region53
    $region52: #{mlp_forward.2} parent=1 // pred_region
      %395 = dma.done [#allocation4], 128
    $region53: #{mlp_forward.2} parent=1 // pred_fallthru
      _
    %396 = vsyncpa [#allocation3], 1
    %397 = vsyncpa [#allocation6], 1
    %398 = vsyncpa [#allocation9], 1
    %399 = vsyncpa [#allocation4], 1

</llo_original>
